<compile_context>
chip_gen: v7x
topology: tpu7x:2x2x1
jax: 0.10.0
libtpu: 0.0.40
codegen_flags: <defaults>
</compile_context>

<pallas_src>
import jax
import jax.numpy as jnp
from jax.experimental import pallas as pl
from jax.experimental.pallas import tpu as pltpu

NUM_CLASSES = 512  # contrastive feature dim consumed by nn.Linear(512, 1)


def _controls_kernel(img_ref, lid_ref, wimg_ref, wlid_ref, b_ref, out_ref):
    # steering[b] = sum_d img[b,d]*w_img[d] + sum_d lid[b,d]*w_lid[d] + bias
    # (normalization, contrastive projection and Linear(512,1) are pre-folded
    #  into wimg/wlid/b on the host).  VPU multiply + XLU lane reduction only.
    s = jnp.sum(img_ref[...] * wimg_ref[...], axis=-1, keepdims=True)   # (tb, 1)
    s = s + jnp.sum(lid_ref[...] * wlid_ref[...], axis=-1, keepdims=True)
    out_ref[...] = (s + b_ref[...]).astype(out_ref.dtype)               # (tb, 1)


def init_params(key, c_img=3, c_lid=2, H=16, W=16):
    HW = H * W
    k1, k2, k3, k4, k5 = jax.random.split(key, 5)
    s = 0.02
    return {
        # TODO(synk): the real `contrastive_model` is injected at __init__ and its
        # architecture is not defined in this module; stand-in = deterministic
        # linear projection of the (normalized image, lidar) features to 512 dims.
        "w_img": s * jax.random.normal(k1, (c_img * HW, NUM_CLASSES), jnp.float32),
        "w_lid": s * jax.random.normal(k2, (c_lid * HW, NUM_CLASSES), jnp.float32),
        "b_c":   s * jax.random.normal(k3, (1, NUM_CLASSES), jnp.float32),
        # nn.Linear(512, 1): torch weight is (1, 512); stored pre-transposed.
        "w_fc":  s * jax.random.normal(k4, (NUM_CLASSES, 1), jnp.float32),
        "b_fc":  s * jax.random.normal(k5, (1, 1), jnp.float32),
    }


def fold_params(params, *, c_img=3, c_lid=2, H=16, W=16, normalize=True):
    """One-time host-side prep: collapse normalization, the linear contrastive
    stand-in and nn.Linear(512,1) into two weight rows and one scalar bias.

    NOTE: this collapse is exact only while the contrastive stand-in is a pure
    linear projection; revert to in-kernel ops when the real contrastive_model
    is injected.
    """
    HW = H * W
    if normalize:
        mean_c = jnp.array([0.485, 0.456, 0.406], jnp.float32)   # assumes c_img == 3
        std_c = jnp.array([0.229, 0.224, 0.225], jnp.float32)
    else:
        mean_c = jnp.zeros((c_img,), jnp.float32)
        std_c = jnp.ones((c_img,), jnp.float32)
    inv_std = jnp.repeat(1.0 / std_c, HW)                        # (c_img*HW,)
    neg_mean_over_std = jnp.repeat(-mean_c / std_c, HW)          # (c_img*HW,)

    w_fc = params["w_fc"]                                        # (512, 1)
    # (img - mean)/std @ W_img @ w_fc == img @ ((1/std * W_img) @ w_fc) + const
    w_img_col = (params["w_img"] * inv_std[:, None]) @ w_fc      # (c_img*HW, 1)
    w_lid_col = params["w_lid"] @ w_fc                           # (c_lid*HW, 1)
    b_ft = params["b_c"] + neg_mean_over_std[None, :] @ params["w_img"]   # (1, 512)
    bias = b_ft @ w_fc + params["b_fc"]                          # (1, 1) scalar

    return {
        "w_img_row": w_img_col.reshape(1, c_img * HW).astype(jnp.float32),
        "w_lid_row": w_lid_col.reshape(1, c_lid * HW).astype(jnp.float32),
        "bias": bias.astype(jnp.float32),
    }


def controls_model_linear(image, lidar, folded):
    B, c_img, H, W = image.shape
    _, c_lid, _, _ = lidar.shape
    HW = H * W
    d_img = c_img * HW      # 768: multiple of 128 -> lane-dense blocks
    d_lid = c_lid * HW      # 512

    # Free row-major reshapes (match torch flatten); no concat / dtype cast /
    # extra HBM materialization in the wrapper.
    img = image.reshape(B, d_img).astype(jnp.float32)
    lid = lidar.reshape(B, d_lid).astype(jnp.float32)

    # Batch tiling: pad to sublane multiple, big tiles (per-step overhead
    # ~0.35 us), but keep >=2 grid steps when possible so both TensorCores are
    # used on v7x (cheap now that resident weights are only ~5 KB).
    b_pad8 = ((B + 7) // 8) * 8
    tb = min(1024, b_pad8)
    if b_pad8 // tb < 2 and b_pad8 >= 16:
        tb = max(8, ((b_pad8 // 2) // 8) * 8)
    b_pad = ((b_pad8 + tb - 1) // tb) * tb
    if b_pad != B:
        img = jnp.pad(img, ((0, b_pad - B), (0, 0)))
        lid = jnp.pad(lid, ((0, b_pad - B), (0, 0)))

    out = pl.pallas_call(
        _controls_kernel,
        out_shape=jax.ShapeDtypeStruct((b_pad, 1), jnp.float32),
        grid_spec=pltpu.PrefetchScalarGridSpec(
            num_scalar_prefetch=0,
            grid=(b_pad // tb,),
            in_specs=[
                pl.BlockSpec((tb, d_img), lambda i: (i, 0)),     # image activations
                pl.BlockSpec((tb, d_lid), lambda i: (i, 0)),     # lidar activations
                pl.BlockSpec((1, d_img), lambda i: (0, 0)),      # folded image weight row (resident)
                pl.BlockSpec((1, d_lid), lambda i: (0, 0)),      # folded lidar weight row (resident)
                pl.BlockSpec((1, 1), lambda i: (0, 0)),          # folded scalar bias
            ],
            out_specs=pl.BlockSpec((tb, 1), lambda i: (i, 0)),   # tiny (tb,1) writeback
        ),
        compiler_params=pltpu.CompilerParams(
            dimension_semantics=("parallel",),                   # batch shards across TCs on v7x
            vmem_limit_bytes=32 * 1024 * 1024,                   # headroom for tb=1024 on v5e
        ),
    )(img, lid, folded["w_img_row"], folded["w_lid_row"], folded["bias"])

    return out[:B]


def _reference(image, lidar, params, normalize=True):
    """Pure-JAX f32 reference of the module's forward pass (with linear stand-in)."""
    B, c_img, H, W = image.shape
    _, c_lid, _, _ = lidar.shape
    HW = H * W
    img = image
    if normalize:
        mean = jnp.array([0.485, 0.456, 0.406], jnp.float32).reshape(1, 3, 1, 1)
        std = jnp.array([0.229, 0.224, 0.225], jnp.float32).reshape(1, 3, 1, 1)
        img = (img - mean) / std
    img2 = img.reshape(B, c_img * HW)
    lid2 = lidar.reshape(B, c_lid * HW)
    ft = img2 @ params["w_img"] + lid2 @ params["w_lid"] + params["b_c"]
    return ft @ params["w_fc"] + params["b_fc"]


if __name__ == "__main__":
    key = jax.random.PRNGKey(0)
    k_img, k_lid, k_p = jax.random.split(key, 3)

    # image: 3 channels (ImageNet normalization), lidar: in_channels=2 (module default)
    image = jax.random.uniform(k_img, (2, 3, 16, 16), dtype=jnp.float32)
    lidar = jax.random.uniform(k_lid, (2, 2, 16, 16), dtype=jnp.float32)
    params = init_params(k_p, c_img=3, c_lid=2, H=16, W=16)
    folded = fold_params(params, c_img=3, c_lid=2, H=16, W=16, normalize=True)

    out = jax.jit(controls_model_linear)(image, lidar, folded)
    jax.block_until_ready(out)
    assert out.shape == (2, 1) and out.dtype == jnp.float32

    # All-f32 path: only reassociation differences vs the reference remain.
    ref = _reference(image, lidar, params, normalize=True)
    assert jnp.allclose(out, ref, atol=1e-3, rtol=1e-3), (out, ref)

    print("KERNEL_OK")
</pallas_src>

<mosaic_0001>
module attributes {stable_mosaic.version = 11 : i64} {
  func.func @_controls_kernel(%arg0: i32, %arg1: memref<8x768xf32, #tpu.memory_space<vmem>>, %arg2: memref<8x512xf32, #tpu.memory_space<vmem>>, %arg3: memref<1x768xf32, #tpu.memory_space<vmem>>, %arg4: memref<1x512xf32, #tpu.memory_space<vmem>>, %arg5: memref<1x1xf32, #tpu.memory_space<vmem>>, %arg6: memref<8x1xf32, #tpu.memory_space<vmem>>) attributes {dimension_semantics = [#tpu.dimension_semantics<parallel>], iteration_bounds = array<i64: 1>, scalar_prefetch = 0 : i64, scratch_operands = 0 : i64, tpu.core_type = #tpu.core_type<tc>, window_params = [{transform_indices = @transform_0, window_bounds = array<i64: 8, 768>}, {transform_indices = @transform_1, window_bounds = array<i64: 8, 512>}, {pipeline_mode = #tpu.pipeline_mode<synchronous>, transform_indices = @transform_2, window_bounds = array<i64: 1, 768>}, {pipeline_mode = #tpu.pipeline_mode<synchronous>, transform_indices = @transform_3, window_bounds = array<i64: 1, 512>}, {pipeline_mode = #tpu.pipeline_mode<synchronous>, transform_indices = @transform_4, window_bounds = array<i64: 1, 1>}, {transform_indices = @transform_5, window_bounds = array<i64: 8, 1>}]} {
    %c0 = arith.constant 0 : index
    %c0_0 = arith.constant 0 : index
    %0 = vector.load %arg1[%c0, %c0_0] : memref<8x768xf32, #tpu.memory_space<vmem>>, vector<8x768xf32>
    %c0_1 = arith.constant 0 : index
    %c0_2 = arith.constant 0 : index
    %1 = vector.load %arg3[%c0_1, %c0_2] : memref<1x768xf32, #tpu.memory_space<vmem>>, vector<1x768xf32>
    %2 = vector.broadcast %1 : vector<1x768xf32> to vector<8x768xf32>
    %3 = arith.mulf %0, %2 : vector<8x768xf32>
    %cst = arith.constant dense<0.000000e+00> : vector<8xf32>
    %4 = vector.multi_reduction <add>, %3, %cst [1] : vector<8x768xf32> to vector<8xf32>
    %5 = vector.shape_cast %4 : vector<8xf32> to vector<8x1xf32>
    %c0_3 = arith.constant 0 : index
    %c0_4 = arith.constant 0 : index
    %6 = vector.load %arg2[%c0_3, %c0_4] : memref<8x512xf32, #tpu.memory_space<vmem>>, vector<8x512xf32>
    %c0_5 = arith.constant 0 : index
    %c0_6 = arith.constant 0 : index
    %7 = vector.load %arg4[%c0_5, %c0_6] : memref<1x512xf32, #tpu.memory_space<vmem>>, vector<1x512xf32>
    %8 = vector.broadcast %7 : vector<1x512xf32> to vector<8x512xf32>
    %9 = arith.mulf %6, %8 : vector<8x512xf32>
    %cst_7 = arith.constant dense<0.000000e+00> : vector<8xf32>
    %10 = vector.multi_reduction <add>, %9, %cst_7 [1] : vector<8x512xf32> to vector<8xf32>
    %11 = vector.shape_cast %10 : vector<8xf32> to vector<8x1xf32>
    %12 = arith.addf %5, %11 : vector<8x1xf32>
    %c0_8 = arith.constant 0 : index
    %c0_9 = arith.constant 0 : index
    %13 = vector.load %arg5[%c0_8, %c0_9] : memref<1x1xf32, #tpu.memory_space<vmem>>, vector<1x1xf32>
    %14 = vector.broadcast %13 : vector<1x1xf32> to vector<8x1xf32>
    %15 = arith.addf %12, %14 : vector<8x1xf32>
    %c0_10 = arith.constant 0 : index
    %c0_11 = arith.constant 0 : index
    %16 = vector.load %arg6[%c0_10, %c0_11] : memref<8x1xf32, #tpu.memory_space<vmem>>, vector<8x1xf32>
    tpu.vector_store %arg6[%c0_10, %c0_11], %15 {strides = array<i32>} : memref<8x1xf32, #tpu.memory_space<vmem>>, vector<8x1xf32>,
    return
  }
  func.func @transform_0(%arg0: i32) -> (i32, i32) {
    %c0_i32 = arith.constant 0 : i32
    %c0_i32_0 = arith.constant 0 : i32
    return %arg0, %c0_i32 : i32, i32
  }
  func.func @transform_1(%arg0: i32) -> (i32, i32) {
    %c0_i32 = arith.constant 0 : i32
    %c0_i32_0 = arith.constant 0 : i32
    return %arg0, %c0_i32 : i32, i32
  }
  func.func @transform_2(%arg0: i32) -> (i32, i32) {
    %c0_i32 = arith.constant 0 : i32
    %c0_i32_0 = arith.constant 0 : i32
    %c0_i32_1 = arith.constant 0 : i32
    return %c0_i32, %c0_i32_0 : i32, i32
  }
  func.func @transform_3(%arg0: i32) -> (i32, i32) {
    %c0_i32 = arith.constant 0 : i32
    %c0_i32_0 = arith.constant 0 : i32
    %c0_i32_1 = arith.constant 0 : i32
    return %c0_i32, %c0_i32_0 : i32, i32
  }
  func.func @transform_4(%arg0: i32) -> (i32, i32) {
    %c0_i32 = arith.constant 0 : i32
    %c0_i32_0 = arith.constant 0 : i32
    %c0_i32_1 = arith.constant 0 : i32
    return %c0_i32, %c0_i32_0 : i32, i32
  }
  func.func @transform_5(%arg0: i32) -> (i32, i32) {
    %c0_i32 = arith.constant 0 : i32
    %c0_i32_0 = arith.constant 0 : i32
    return %arg0, %c0_i32 : i32, i32
  }
}

</mosaic_0001>

<llo_original>
// kernel: controls_model_linear.1
$region0: #{controls_model_linear.1}
  #allocation0 [shape = 'u32[]', space=smem, size = 0x4, offset = 0x4, fixed_abs, tag = 'smem constant byte address 0x4 - core index']
  #allocation1 [shape = 'u32[144,128]{1,0:T(1,128)}', space=vmem, size = 0x12000, scoped, tag = 'internal scratch']
  #allocation2 [shape = 'f32[1,1]{1,0:T(1,128)S(1)}', space=vmem, size = 0x200, scoped, tag = 'scoped memory for controls_model_linear.1']
  %s0 = inlined_call_operand.vmem [shape: f32[8,768], index: 0, kind: input, shape index: {}]
  %s1 = inlined_call_operand.vmem [shape: f32[8,512], index: 1, kind: input, shape index: {}]
  %s2 = inlined_call_operand.vmem [shape: f32[1,768], index: 2, kind: input, shape index: {}]
  %s3 = inlined_call_operand.vmem [shape: f32[1,512], index: 3, kind: input, shape index: {}]
  %s4 = inlined_call_operand.<no memory space> [shape: f32[1,1], index: 4, kind: input, shape index: {}]
  %s5 = inlined_call_operand.vmem [shape: f32[8,1], index: 5, kind: output, shape index: {}]
  %s6 = sld [smem:[#allocation0]]
  $region30: #{controls_model_linear.1} parent=0
    _
  %s8 = ssub.s32 1, %s6
  %s9 = scalar_select 0, %s8, %s6
  %v10 = vstv %s4
  %11 = vst [vmem:[#allocation2] sm:$0x1] %v10
  // Predicated region
  $region2: #{controls_model_linear.1} parent=0 // pred_check
    _
  $region3: #{controls_model_linear.1} parent=0 // pred_check_branch
    %13 = sbr.rel (0) target = $region5
  $region4: #{controls_model_linear.1} parent=0 // pred_region
    _
  $region5: #{controls_model_linear.1} parent=0 // pred_fallthru
    _
  // Predicated region
  $region6: #{controls_model_linear.1} parent=0 // pred_check
    _
  $region7: #{controls_model_linear.1} parent=0 // pred_check_branch
    %15 = sbr.rel (0) target = $region9
  $region8: #{controls_model_linear.1} parent=0 // pred_region
    _
  $region9: #{controls_model_linear.1} parent=0 // pred_fallthru
    _
  // Predicated region
  $region10: #{controls_model_linear.1} parent=0 // pred_check
    _
  $region11: #{controls_model_linear.1} parent=0 // pred_check_branch
    %17 = sbr.rel (0) target = $region13
  $region12: #{controls_model_linear.1} parent=0 // pred_region
    _
  $region13: #{controls_model_linear.1} parent=0 // pred_fallthru
    _
  // Predicated region
  $region14: #{controls_model_linear.1} parent=0 // pred_check
    _
  $region15: #{controls_model_linear.1} parent=0 // pred_check_branch
    %19 = sbr.rel (0) target = $region17
  $region16: #{controls_model_linear.1} parent=0 // pred_region
    _
  $region17: #{controls_model_linear.1} parent=0 // pred_fallthru
    _
  // Predicated region
  $region18: #{controls_model_linear.1} parent=0 // pred_check
    _
  $region19: #{controls_model_linear.1} parent=0 // pred_check_branch
    %21 = sbr.rel (0) target = $region21
  $region20: #{controls_model_linear.1} parent=0 // pred_region
    _
  $region21: #{controls_model_linear.1} parent=0 // pred_fallthru
    _
  %v22 = vld [vmem:[%s0] sm:$0xff]
  %v23 = vld [vmem:[%s0 + $0x8] sm:$0xff]
  %v24 = vld [vmem:[%s0 + $0x10] sm:$0xff]
  %v25 = vld [vmem:[%s0 + $0x18] sm:$0xff]
  %v26 = vld [vmem:[%s0 + $0x20] sm:$0xff]
  %v27 = vld [vmem:[%s0 + $0x28] sm:$0xff]
  %v28 = vld [vmem:[%s2] sm:$0x3f]
  %v30 = vlaneseq
  %v31 = vshrl.u32 %v30, 7
  %v32 = vsub.s32 0, %v31
  %v33 = vrot.slane %v28, %v32
  %v34 = vlaneseq
  %v35 = vshrl.u32 %v34, 7
  %v36 = vsub.s32 1, %v35
  %v37 = vrot.slane %v28, %v36
  %v38 = vlaneseq
  %v39 = vshrl.u32 %v38, 7
  %v40 = vsub.s32 2, %v39
  %v41 = vrot.slane %v28, %v40
  %v42 = vlaneseq
  %v43 = vshrl.u32 %v42, 7
  %v44 = vsub.s32 3, %v43
  %v45 = vrot.slane %v28, %v44
  %v46 = vlaneseq
  %v47 = vshrl.u32 %v46, 7
  %v48 = vsub.s32 4, %v47
  %v49 = vrot.slane %v28, %v48
  %v50 = vlaneseq
  %v51 = vshrl.u32 %v50, 7
  %v52 = vsub.s32 5, %v51
  %v53 = vrot.slane %v28, %v52
  %v60 = vmul.f32 %v22, %v33
  %v61 = vmul.f32 %v23, %v37
  %v62 = vmul.f32 %v24, %v41
  %v63 = vmul.f32 %v25, %v45
  %v64 = vmul.f32 %v26, %v49
  %v65 = vmul.f32 %v27, %v53
  %v66 = vadd.f32 %v60, %v61
  %v67 = vadd.f32 %v66, %v62
  %v68 = vadd.f32 %v67, %v63
  %v69 = vadd.f32 %v68, %v64
  %v70 = vadd.f32 %v69, %v65
  %71 = vadd.xlane.f32.xlu0 %v70
  %v72 = vpop.xlane.xlu0 %71
  %v73 = vld [vmem:[%s1] sm:$0xff]
  %v74 = vld [vmem:[%s1 + $0x8] sm:$0xff]
  %v75 = vld [vmem:[%s1 + $0x10] sm:$0xff]
  %v76 = vld [vmem:[%s1 + $0x18] sm:$0xff]
  %v77 = vld [vmem:[%s3] sm:$0xf]
  %v79 = vlaneseq
  %v80 = vshrl.u32 %v79, 7
  %v81 = vsub.s32 0, %v80
  %v82 = vrot.slane %v77, %v81
  %v83 = vlaneseq
  %v84 = vshrl.u32 %v83, 7
  %v85 = vsub.s32 1, %v84
  %v86 = vrot.slane %v77, %v85
  %v87 = vlaneseq
  %v88 = vshrl.u32 %v87, 7
  %v89 = vsub.s32 2, %v88
  %v90 = vrot.slane %v77, %v89
  %v91 = vlaneseq
  %v92 = vshrl.u32 %v91, 7
  %v93 = vsub.s32 3, %v92
  %v94 = vrot.slane %v77, %v93
  %v99 = vmul.f32 %v73, %v82
  %v100 = vmul.f32 %v74, %v86
  %v101 = vmul.f32 %v75, %v90
  %v102 = vmul.f32 %v76, %v94
  %v103 = vadd.f32 %v99, %v100
  %v104 = vadd.f32 %v103, %v101
  %v105 = vadd.f32 %v104, %v102
  %106 = vadd.xlane.f32.xlu0 %v105
  %v107 = vpop.xlane.xlu0 %106
  %v108 = vadd.f32 %v72, %v107
  %v109 = vld [vmem:[#allocation2] sm:$0x1]
  %v111 = vlaneseq
  %v112 = vshrl.u32 %v111, 7
  %v113 = vsub.s32 0, %v112
  %v114 = vrot.slane %v109, %v113
  %v116 = vadd.f32 %v108, %v114
  %vm117 = vcmask 7168
  %118 = vst.msk [vmem:[%s5] sm:$0xff] %vm117, %v116
  // Predicated region
  $region22: #{controls_model_linear.1} parent=0 // pred_check
    _
  $region23: #{controls_model_linear.1} parent=0 // pred_check_branch
    %120 = sbr.rel (0) target = $region25
  $region24: #{controls_model_linear.1} parent=0 // pred_region
    _
  $region25: #{controls_model_linear.1} parent=0 // pred_fallthru
    _
  // Predicated region
  $region26: #{controls_model_linear.1} parent=0 // pred_check
    _
  $region27: #{controls_model_linear.1} parent=0 // pred_check_branch
    %122 = sbr.rel (0) target = $region29
  $region28: #{controls_model_linear.1} parent=0 // pred_region
    _
  $region29: #{controls_model_linear.1} parent=0 // pred_fallthru
    _

</llo_original>
